<compile_context>
chip_gen: v7x
topology: tpu7x:2x2x1
jax: 0.10.0
libtpu: 0.0.40
codegen_flags: <defaults>
</compile_context>

<pallas_src>
import functools

import jax
import jax.numpy as jnp
from jax.experimental import pallas as pl
from jax.experimental.pallas import tpu as pltpu


def _round_up(v, m):
    return ((v + m - 1) // m) * m


def _padded_2d_bytes(rows, cols, itemsize):
    """VMEM bytes of a (rows, cols) tile after (sublane, lane) layout padding."""
    sublane = 8 * (4 // itemsize)  # f32 -> 8, bf16 -> 16, int8 -> 32
    return _round_up(max(rows, 1), sublane) * _round_up(max(cols, 1), 128) * itemsize


def _gcn_kernel(x_ref, adj_ref, w_ref, out_ref, *, c, fold_batch):
    # x_ref  : (Bt, N, Din)   batch tile of node features
    # adj_ref: (Bt, N, N)     batch tile of adjacency matrices
    # w_ref  : (Din, Dout)    shared weight (fetched once; constant index map)
    # out_ref: (Bt, N, Dout)
    Bt, N, Din = x_ref.shape
    Dout = w_ref.shape[1]

    x = x_ref[...]
    w = w_ref[...]

    if fold_batch:
        # Fold the batch tile into the MXU M dimension. Free relayout because
        # N % 8 == 0 (whole sublane tiles per sample).
        xw = jnp.dot(
            x.reshape(Bt * N, Din), w, preferred_element_type=jnp.float32
        ).reshape(Bt, N, Dout)
    else:
        xw = jnp.einsum("bnd,de->bne", x, w, preferred_element_type=jnp.float32)

    adj = adj_ref[...]
    # Per-sample adjacency contraction (adj is batch-specific, cannot be fused).
    # With bf16 inputs, xw is cast down so the second matmul also runs bf16 on
    # the MXU with f32 accumulation; with f32 inputs the cast is a no-op.
    axw = jnp.einsum(
        "bij,bjd->bid", adj, xw.astype(adj.dtype), preferred_element_type=jnp.float32
    )
    out_ref[...] = (c * axw).astype(out_ref.dtype)


def gcn_forward(x, adj, kernel, *, c=0.85, neg_penalty=0.2,
                batch_tile=None, use_bf16=False):
    """Returns (c * adj @ (x @ kernel), neg_loss).

    x      : (B, N, Din)
    adj    : (B, N, N)
    kernel : (Din, Dout)
    """
    B, N, Din = x.shape
    assert adj.shape == (B, N, N), "adj must be (B, N, N)"
    Din_w, Dout = kernel.shape
    assert Din_w == Din, "kernel first dim must match feature dim"

    if use_bf16:
        # In a real pipeline the caller should already hold x/adj in bf16 in HBM
        # (that is where the ~2x HBM-byte saving comes from); this cast is only
        # for the standalone demo path.
        x = x.astype(jnp.bfloat16)
        adj = adj.astype(jnp.bfloat16)
        w = kernel.astype(jnp.bfloat16)
    else:
        w = kernel

    out_dtype = x.dtype
    in_isz = jnp.dtype(x.dtype).itemsize
    out_isz = jnp.dtype(out_dtype).itemsize

    # ---- honest per-sample VMEM footprint (post lane/sublane layout padding) --
    x_s = _padded_2d_bytes(N, Din, in_isz)
    adj_s = _padded_2d_bytes(N, N, in_isz)       # N lanes -> padded to 128
    out_s = _padded_2d_bytes(N, Dout, out_isz)
    inter_s = 2 * _padded_2d_bytes(N, Dout, 4)   # xw + axw f32 intermediates
    w_bytes = _padded_2d_bytes(Din, Dout, in_isz)
    headroom = 2 << 20                           # compiler-internal scratch

    try:
        vmem_cap = int(pltpu.get_tpu_info().vmem_capacity_bytes)  # 64 MiB v7x, 128 MiB v5e/v6e
    except Exception:
        vmem_cap = 64 << 20                       # conservative fallback
    budget = int(0.75 * vmem_cap)                 # leave room for spills/scratch

    per_sample = x_s + adj_s + out_s

    def vmem_need(bt):
        # double-buffered in/out blocks + intermediates + weight (2 buffers).
        return 2 * bt * per_sample + bt * inter_s + 2 * w_bytes + headroom

    if batch_tile is None:
        # Multi-MiB blocks to amortize per-step pipeline overhead, but keep the
        # grid length >= 2 when B > 1 so v7x megacore splits work across both
        # TensorCores, and stay within the generation-specific VMEM budget.
        bt_cap = B if B <= 1 else -(-B // 2)                      # ceil(B/2)
        bt_target = max(1, (4 << 20) // per_sample)               # ~4 MiB of blocks
        bt_budget = max(1, (budget - 2 * w_bytes - headroom)
                        // (2 * per_sample + inter_s))
        batch_tile = max(1, min(bt_cap, bt_target, bt_budget))
    Bt = int(batch_tile)

    grid = (pl.cdiv(B, Bt),)                      # overhanging last block: OOB
    #                                               reads undefined, OOB writes dropped
    vmem_limit = int(min(budget, max(vmem_need(Bt), 32 << 20)))

    fold_batch = (N % 8 == 0)                     # reshape is free only if sublane-aligned
    kernel_fn = functools.partial(_gcn_kernel, c=c, fold_batch=fold_batch)

    grid_spec = pltpu.PrefetchScalarGridSpec(
        num_scalar_prefetch=0,
        grid=grid,
        in_specs=[
            pl.BlockSpec((Bt, N, Din), lambda b: (b, 0, 0)),
            pl.BlockSpec((Bt, N, N), lambda b: (b, 0, 0)),
            # Full-array weight block with a constant index map: the pipeline
            # only fetches it once. (pl.Buffered(1) skipped: double buffer of a
            # 48x48 weight is negligible and not worth lowering risk.)
            pl.BlockSpec((Din, Dout), lambda b: (0, 0)),
        ],
        out_specs=pl.BlockSpec((Bt, N, Dout), lambda b: (b, 0, 0)),
    )

    out = pl.pallas_call(
        kernel_fn,
        out_shape=jax.ShapeDtypeStruct((B, N, Dout), out_dtype),
        grid_spec=grid_spec,
        compiler_params=pltpu.CompilerParams(
            dimension_semantics=("parallel",),    # batch steps independent -> megacore
            vmem_limit_bytes=vmem_limit,
        ),
    )(x, adj, w)

    # neg-penalty loss: depends only on the weight -> plain JAX, outside the kernel.
    neg_loss = neg_penalty * jnp.sum(jax.nn.relu(1e-6 - kernel))
    return out, neg_loss


def kaiming_normal(key, in_dim, out_dim):
    # nn.init.kaiming_normal_ on a (in_dim, out_dim) 2-D tensor:
    # fan_in = dim-1 size (= out_dim), gain = sqrt(2)
    std = jnp.sqrt(2.0 / out_dim)
    return std * jax.random.normal(key, (in_dim, out_dim), dtype=jnp.float32)


if __name__ == "__main__":
    # Small shapes matching the module defaults: in_dim = out_dim = 48.
    B, N, D = 2, 16, 48
    key = jax.random.PRNGKey(0)
    kx, ka, kw = jax.random.split(key, 3)

    x = jax.random.normal(kx, (B, N, D), dtype=jnp.float32)
    adj = jax.random.uniform(ka, (B, N, N), dtype=jnp.float32)
    kernel = kaiming_normal(kw, D, D)

    out, neg_loss = gcn_forward(x, adj, kernel)
    out = jax.block_until_ready(out)
    neg_loss = jax.block_until_ready(neg_loss)

    # reference check in plain JAX (default f32 path; bf16 path needs looser tol)
    ref_out = 0.85 * jnp.matmul(adj, jnp.einsum("bnd,de->bne", x, kernel))
    ref_loss = 0.2 * jnp.sum(jax.nn.relu(1e-6 - kernel))
    assert out.shape == ref_out.shape
    assert jnp.allclose(out, ref_out, atol=1e-4, rtol=1e-4)
    assert jnp.allclose(neg_loss, ref_loss, atol=1e-6)

    # TODO(synk): the `x is None` branch (adj @ kernel tensordot), the in-forward
    # print() side-effect, the unused torch.eye(), and the self.losses.append()
    # side-effect of the PyTorch module are not replicated in the kernel.
    print("KERNEL_OK")
</pallas_src>

<mosaic_0001>
module attributes {stable_mosaic.version = 11 : i64} {
  func.func @_gcn_kernel(%arg0: i32, %arg1: memref<1x16x48xf32, #tpu.memory_space<vmem>>, %arg2: memref<1x16x16xf32, #tpu.memory_space<vmem>>, %arg3: memref<48x48xf32, #tpu.memory_space<vmem>>, %arg4: memref<1x16x48xf32, #tpu.memory_space<vmem>>) attributes {dimension_semantics = [#tpu.dimension_semantics<parallel>], iteration_bounds = array<i64: 2>, scalar_prefetch = 0 : i64, scratch_operands = 0 : i64, tpu.core_type = #tpu.core_type<tc>, window_params = [{transform_indices = @transform_0, window_bounds = array<i64: 1, 16, 48>}, {transform_indices = @transform_1, window_bounds = array<i64: 1, 16, 16>}, {pipeline_mode = #tpu.pipeline_mode<synchronous>, transform_indices = @transform_2, window_bounds = array<i64: 48, 48>}, {transform_indices = @transform_3, window_bounds = array<i64: 1, 16, 48>}]} {
    %c0 = arith.constant 0 : index
    %c0_0 = arith.constant 0 : index
    %c0_1 = arith.constant 0 : index
    %0 = vector.load %arg1[%c0, %c0_0, %c0_1] : memref<1x16x48xf32, #tpu.memory_space<vmem>>, vector<1x16x48xf32>
    %c0_2 = arith.constant 0 : index
    %c0_3 = arith.constant 0 : index
    %1 = vector.load %arg3[%c0_2, %c0_3] : memref<48x48xf32, #tpu.memory_space<vmem>>, vector<48x48xf32>
    %2 = vector.shape_cast %0 : vector<1x16x48xf32> to vector<16x48xf32>
    %cst = arith.constant dense<0.000000e+00> : vector<16x48xf32>
    %3 = tpu.matmul %2, %1, %cst {dimension_numbers = #tpu.dot_dimension_numbers<[1], [0], [0], [1], [0, 0, 1, 1], [], []>} : vector<16x48xf32>, vector<48x48xf32>, vector<16x48xf32> -> vector<16x48xf32>
    %4 = vector.shape_cast %3 : vector<16x48xf32> to vector<1x16x48xf32>
    %c0_4 = arith.constant 0 : index
    %c0_5 = arith.constant 0 : index
    %c0_6 = arith.constant 0 : index
    %5 = vector.load %arg2[%c0_4, %c0_5, %c0_6] : memref<1x16x16xf32, #tpu.memory_space<vmem>>, vector<1x16x16xf32>
    "tpu.trace_start"() <{level = 10 : i32, message = "bij,bjd->bid"}> : () -> ()
    %cst_7 = arith.constant dense<0.000000e+00> : vector<1x16x48xf32>
    %6 = tpu.matmul %5, %4, %cst_7 {dimension_numbers = #tpu.dot_dimension_numbers<[2], [1], [1], [2], [0, 0, 0, 1, 1, 2], [0], [0]>} : vector<1x16x16xf32>, vector<1x16x48xf32>, vector<1x16x48xf32> -> vector<1x16x48xf32>
    "tpu.trace_stop"() : () -> ()
    %cst_8 = arith.constant 8.500000e-01 : f32
    %7 = vector.broadcast %cst_8 : f32 to vector<1x16x48xf32>
    %8 = arith.mulf %7, %6 : vector<1x16x48xf32>
    %c0_9 = arith.constant 0 : index
    %c0_10 = arith.constant 0 : index
    %c0_11 = arith.constant 0 : index
    %9 = vector.load %arg4[%c0_9, %c0_10, %c0_11] : memref<1x16x48xf32, #tpu.memory_space<vmem>>, vector<1x16x48xf32>
    tpu.vector_store %arg4[%c0_9, %c0_10, %c0_11], %8 {strides = array<i32>} : memref<1x16x48xf32, #tpu.memory_space<vmem>>, vector<1x16x48xf32>,
    return
  }
  func.func @transform_0(%arg0: i32) -> (i32, i32, i32) {
    %c0_i32 = arith.constant 0 : i32
    %c0_i32_0 = arith.constant 0 : i32
    %c0_i32_1 = arith.constant 0 : i32
    return %arg0, %c0_i32, %c0_i32_0 : i32, i32, i32
  }
  func.func @transform_1(%arg0: i32) -> (i32, i32, i32) {
    %c0_i32 = arith.constant 0 : i32
    %c0_i32_0 = arith.constant 0 : i32
    %c0_i32_1 = arith.constant 0 : i32
    return %arg0, %c0_i32, %c0_i32_0 : i32, i32, i32
  }
  func.func @transform_2(%arg0: i32) -> (i32, i32) {
    %c0_i32 = arith.constant 0 : i32
    %c0_i32_0 = arith.constant 0 : i32
    %c0_i32_1 = arith.constant 0 : i32
    return %c0_i32, %c0_i32_0 : i32, i32
  }
  func.func @transform_3(%arg0: i32) -> (i32, i32, i32) {
    %c0_i32 = arith.constant 0 : i32
    %c0_i32_0 = arith.constant 0 : i32
    %c0_i32_1 = arith.constant 0 : i32
    return %arg0, %c0_i32, %c0_i32_0 : i32, i32, i32
  }
}

</mosaic_0001>

<llo_original>
// kernel: tpu_custom_call.1
$region0: #{tpu_custom_call.1}
  #allocation0 [shape = 'u32[]', space=smem, size = 0x4, offset = 0x4, fixed_abs, tag = 'smem constant byte address 0x4 - core index']
  #allocation1 [shape = 'u32[144,128]{1,0:T(1,128)}', space=vmem, size = 0x12000, scoped, tag = 'internal scratch']
  %s0 = inlined_call_operand.hbm [shape: f32[2,16,48], index: 0, kind: input, shape index: {}]
  %s1 = inlined_call_operand.hbm [shape: f32[2,16,16], index: 1, kind: input, shape index: {}]
  %s2 = inlined_call_operand.hbm [shape: f32[48,48], index: 2, kind: input, shape index: {}]
  %s3 = inlined_call_operand.hbm [shape: f32[2,16,48], index: 3, kind: output, shape index: {}]
  %s4 = sld [smem:[#allocation0]]
  $region57: #{tpu_custom_call.1} parent=0
    _
  %s6 = ssub.s32 1, %s4
  %s7 = scalar_select 0, %s6, %s4
  $region1: #{tpu_custom_call.1} parent=0
    #allocation2 [shape = 'u8[16384]{0}', space=vmem, size = 0x4000, scoped, tag = 'input window, operand 0']
    #allocation3 [shape = 's32[2]{0}', space=sflag, size = 0x8, scoped, tag = 'scoped memory for tpu_custom_call.1']
    #allocation4 [shape = 's32[2]{0}', space=sflag, size = 0x8, scoped, tag = 'scoped memory for tpu_custom_call.1']
    #allocation5 [shape = 'u8[16384]{0}', space=vmem, size = 0x4000, scoped, tag = 'input window, operand 1']
    #allocation6 [shape = 's32[2]{0}', space=sflag, size = 0x8, scoped, tag = 'scoped memory for tpu_custom_call.1']
    #allocation7 [shape = 'u8[24576]{0}', space=vmem, size = 0x6000, scoped, tag = 'input window, operand 2, single buffered']
    #allocation8 [shape = 'u8[16384]{0}', space=vmem, size = 0x4000, scoped, tag = 'output window, operand 0']
    %8 = vsyncpa [#allocation3], 0
    %s9 = scalar_lea.sflag [#allocation3], 1
    %10 = vsyncpa %s9, 0
    %11 = vsyncpa [#allocation6], 0
    %s12 = scalar_lea.sflag [#allocation6], 1
    %13 = vsyncpa %s12, 0
    %14 = vsyncpa [#allocation4], 0
    %s15 = scalar_lea.sflag [#allocation4], 1
    %16 = vsyncpa %s15, 0
    loop: start=0, step=1, limit=4
    $region2: #{tpu_custom_call.1} parent=1 // loop_pre_header
      _
    $region3: #{tpu_custom_call.1} parent=1 // loop_header
      %s18 = sphi 0, %s22
      %p19 = scmp.ge.s32.totalorder %s18, 4
      %s28 = sphi 0, %s30
      %s31 = sphi 0, %s28
      %s32 = sphi 0, %s31
      %s48 = sphi 0, %s32
      %s54 = sphi 0, %s56
      %s57 = sphi 0, %s54
      %s58 = sphi 0, %s57
      %s74 = sphi 0, %s58
      %s78 = sphi 0, %s78
      %s80 = sphi 0, %s78
      %s81 = sphi 0, %s80
      %s95 = sphi 0, %s81
      %s101 = sphi 0, %s103
      %s104 = sphi 0, %s101
      %s105 = sphi 0, %s104
      %s121 = sphi 0, %s105
    $region4: #{tpu_custom_call.1} parent=1 // loop_header_branch
      %21 = sbr.rel (%p19) target = $region8
    $region5: #{tpu_custom_call.1} parent=1 // loop_body
      %s23 = ssub.s32 %s18, 1
      %s24 = ssub.s32 %s18, 2
      %s25 = sadd.s32 %s18, 1
      %s26 = ssub.s32 %s18, %s25
      %p27 = scmp.eq.s32.totalorder %s26, 0
      %s29 = sadd.s32 %s28, 1
      %s30 = scalar_select %p27, %s28, %s29
      %p33 = pneg %p27
      %p34 = scmp.eq.s32.totalorder %s18, 1
      %p35 = por %p33, %p34
      %p36 = scmp.ne.s32.totalorder %s28, %s31
      %p37 = scmp.eq.s32.totalorder %s18, 0
      %p38 = por %p36, %p37
      %p39 = scmp.ne.s32.totalorder %s28, %s31
      %p40 = scmp.eq.s32.totalorder %s23, 1
      %p41 = por %p39, %p40
      %p42 = scmp.ne.s32.totalorder %s31, %s32
      %p43 = scmp.eq.s32.totalorder %s23, 0
      %p44 = por %p42, %p43
      %p45 = scmp.ne.s32.totalorder %s31, %s32
      %p46 = scmp.eq.s32.totalorder %s24, 1
      %p47 = por %p45, %p46
      %p49 = scmp.ne.s32.totalorder %s32, %s48
      %p50 = scmp.eq.s32.totalorder %s24, 0
      %p51 = por %p49, %p50
      %s52 = ssub.s32 %s18, %s25
      %p53 = scmp.eq.s32.totalorder %s52, 0
      %s55 = sadd.s32 %s54, 1
      %s56 = scalar_select %p53, %s54, %s55
      %p59 = pneg %p53
      %p60 = scmp.eq.s32.totalorder %s18, 1
      %p61 = por %p59, %p60
      %p62 = scmp.ne.s32.totalorder %s54, %s57
      %p63 = scmp.eq.s32.totalorder %s18, 0
      %p64 = por %p62, %p63
      %p65 = scmp.ne.s32.totalorder %s54, %s57
      %p66 = scmp.eq.s32.totalorder %s23, 1
      %p67 = por %p65, %p66
      %p68 = scmp.ne.s32.totalorder %s57, %s58
      %p69 = scmp.eq.s32.totalorder %s23, 0
      %p70 = por %p68, %p69
      %p71 = scmp.ne.s32.totalorder %s57, %s58
      %p72 = scmp.eq.s32.totalorder %s24, 1
      %p73 = por %p71, %p72
      %p75 = scmp.ne.s32.totalorder %s58, %s74
      %p76 = scmp.eq.s32.totalorder %s24, 0
      %p77 = por %p75, %p76
      %s79 = sadd.s32 %s78, 1
      %p82 = scmp.eq.s32.totalorder %s18, 1
      %p83 = scmp.ne.s32.totalorder %s78, %s80
      %p84 = scmp.eq.s32.totalorder %s18, 0
      %p85 = por %p83, %p84
      %p86 = scmp.ne.s32.totalorder %s78, %s80
      %p87 = scmp.eq.s32.totalorder %s23, 1
      %p88 = por %p86, %p87
      %p89 = scmp.ne.s32.totalorder %s80, %s81
      %p90 = scmp.eq.s32.totalorder %s23, 0
      %p91 = por %p89, %p90
      %p92 = scmp.ne.s32.totalorder %s80, %s81
      %p93 = scmp.eq.s32.totalorder %s24, 1
      %p94 = por %p92, %p93
      %p96 = scmp.ne.s32.totalorder %s81, %s95
      %p97 = scmp.eq.s32.totalorder %s24, 0
      %p98 = por %p96, %p97
      %s99 = ssub.s32 %s18, %s25
      %p100 = scmp.eq.s32.totalorder %s99, 0
      %s102 = sadd.s32 %s101, 1
      %s103 = scalar_select %p100, %s101, %s102
      %p106 = pneg %p100
      %p107 = scmp.eq.s32.totalorder %s18, 1
      %p108 = por %p106, %p107
      %p109 = scmp.ne.s32.totalorder %s101, %s104
      %p110 = scmp.eq.s32.totalorder %s18, 0
      %p111 = por %p109, %p110
      %p112 = scmp.ne.s32.totalorder %s101, %s104
      %p113 = scmp.eq.s32.totalorder %s23, 1
      %p114 = por %p112, %p113
      %p115 = scmp.ne.s32.totalorder %s104, %s105
      %p116 = scmp.eq.s32.totalorder %s23, 0
      %p117 = por %p115, %p116
      %p118 = scmp.ne.s32.totalorder %s104, %s105
      %p119 = scmp.eq.s32.totalorder %s24, 1
      %p120 = por %p118, %p119
      %p122 = scmp.ne.s32.totalorder %s105, %s121
      %p123 = scmp.eq.s32.totalorder %s24, 0
      %p124 = por %p122, %p123
      %p125 = scmp.le.s32.totalorder 1, %s18
      %p126 = scmp.lt.s32.totalorder %s18, 3
      %p127 = pnand %p125, %p126
      %p128 = pneg %p127
      // Predicated region
      $region9: #{tpu_custom_call.1} parent=5 // pred_check
        _
      $region10: #{tpu_custom_call.1} parent=5 // pred_check_branch
        %130 = sbr.rel (%p127) target = $region12
      $region11: #{tpu_custom_call.1} parent=5 // pred_region
        %s131 = ssub.s32 %s18, 1
        // Predicated region
        $region13: #{tpu_custom_call.1} parent=11 // pred_check
          %p132 = pneg %p91
        $region14: #{tpu_custom_call.1} parent=11 // pred_check_branch
          %134 = sbr.rel (%p132) target = $region16
        $region15: #{tpu_custom_call.1} parent=11 // pred_region
          %s136 = ssub.s32 768, 768
          %137 = vsyncadd [#allocation6], %s136
          %s138 = sshll.u32 [#allocation7], 4
          %s139 = int_to_ptr.vmem [resolvable:$true] %s138
          %144 = dma.hbm_to_vmem [thread:$0]  %s2, 768, %s139, [#allocation6], 128, 128, 8
        $region16: #{tpu_custom_call.1} parent=11 // pred_fallthru
          _
      $region12: #{tpu_custom_call.1} parent=5 // pred_fallthru
        _
      %p145 = scmp.lt.s32.totalorder %s18, 2
      // Predicated region
      $region17: #{tpu_custom_call.1} parent=5 // pred_check
        %p146 = pneg %p145
      $region18: #{tpu_custom_call.1} parent=5 // pred_check_branch
        %148 = sbr.rel (%p146) target = $region20
      $region19: #{tpu_custom_call.1} parent=5 // pred_region
        // Predicated region
        $region21: #{tpu_custom_call.1} parent=19 // pred_check
          %p149 = pneg %p38
        $region22: #{tpu_custom_call.1} parent=19 // pred_check_branch
          %151 = sbr.rel (%p149) target = $region24
        $region23: #{tpu_custom_call.1} parent=19 // pred_region
          %s152 = sand.u32 %s28, 1
          %s153 = scalar_lea.sflag [#allocation3], %s152
          %s154 = sand.u32 %s28, 1
          %s155 = smul.addr %s154, 16
          %s156 = scalar_lea.vmem [#allocation2], %s155
          %s158 = ssub.s32 256, 256
          %159 = vsyncadd %s153, %s158
          %s160 = smul.addr %s18, 2
          %s161 = smul.addr %s160, 128
          %s162 = scalar_lea.hbm %s0, %s161
          %s163 = sshll.u32 %s156, 4
          %s164 = int_to_ptr.vmem [resolvable:$true] %s163
          %169 = dma.hbm_to_vmem [thread:$0]  %s162, 256, %s164, %s153, 128, 128, 8
        $region24: #{tpu_custom_call.1} parent=19 // pred_fallthru
          _
        // Predicated region
        $region25: #{tpu_custom_call.1} parent=19 // pred_check
          %p170 = pneg %p64
        $region26: #{tpu_custom_call.1} parent=19 // pred_check_branch
          %172 = sbr.rel (%p170) target = $region28
        $region27: #{tpu_custom_call.1} parent=19 // pred_region
          %s173 = sand.u32 %s18, 1
          %s174 = scalar_lea.sflag [#allocation6], %s173
          %s175 = sand.u32 %s54, 1
          %s176 = smul.addr %s175, 16
          %s177 = scalar_lea.vmem [#allocation5], %s176
          %s179 = ssub.s32 256, 256
          %180 = vsyncadd %s174, %s179
          %s181 = smul.addr %s18, 2
          %s182 = smul.addr %s181, 128
          %s183 = scalar_lea.hbm %s1, %s182
          %s184 = sshll.u32 %s177, 4
          %s185 = int_to_ptr.vmem [resolvable:$true] %s184
          %190 = dma.hbm_to_vmem [thread:$0]  %s183, 256, %s185, %s174, 128, 128, 8
        $region28: #{tpu_custom_call.1} parent=19 // pred_fallthru
          _
      $region20: #{tpu_custom_call.1} parent=5 // pred_fallthru
        _
      %p191 = scmp.le.s32.totalorder 1, %s18
      %p192 = scmp.lt.s32.totalorder %s18, 3
      %p193 = pnand %p191, %p192
      %p194 = pneg %p193
      // Predicated region
      $region29: #{tpu_custom_call.1} parent=5 // pred_check
        _
      $region30: #{tpu_custom_call.1} parent=5 // pred_check_branch
        %196 = sbr.rel (%p193) target = $region32
      $region31: #{tpu_custom_call.1} parent=5 // pred_region
        %s197 = ssub.s32 %s18, 1
        %s198 = sand.u32 %s31, 1
        %s199 = scalar_lea.sflag [#allocation3], %s198
        %s200 = sand.u32 %s31, 1
        %s201 = smul.addr %s200, 16
        %s202 = scalar_lea.vmem [#allocation2], %s201
        // Predicated region
        $region33: #{tpu_custom_call.1} parent=31 // pred_check
          %p203 = pneg %p44
        $region34: #{tpu_custom_call.1} parent=31 // pred_check_branch
          %205 = sbr.rel (%p203) target = $region36
        $region35: #{tpu_custom_call.1} parent=31 // pred_region
          %206 = dma.done %s199, 256
        $region36: #{tpu_custom_call.1} parent=31 // pred_fallthru
          _
        %s207 = sand.u32 %s23, 1
        %s208 = scalar_lea.sflag [#allocation6], %s207
        %s209 = sand.u32 %s57, 1
        %s210 = smul.addr %s209, 16
        %s211 = scalar_lea.vmem [#allocation5], %s210
        // Predicated region
        $region37: #{tpu_custom_call.1} parent=31 // pred_check
          %p212 = pneg %p70
        $region38: #{tpu_custom_call.1} parent=31 // pred_check_branch
          %214 = sbr.rel (%p212) target = $region40
        $region39: #{tpu_custom_call.1} parent=31 // pred_region
          %215 = dma.done %s208, 256
        $region40: #{tpu_custom_call.1} parent=31 // pred_fallthru
          _
        // Predicated region
        $region41: #{tpu_custom_call.1} parent=31 // pred_check
          %p216 = pneg %p91
        $region42: #{tpu_custom_call.1} parent=31 // pred_check_branch
          %218 = sbr.rel (%p216) target = $region44
        $region43: #{tpu_custom_call.1} parent=31 // pred_region
          %219 = dma.done [#allocation6], 768
        $region44: #{tpu_custom_call.1} parent=31 // pred_fallthru
          _
        %s220 = sand.u32 %s31, 1
        %s221 = scalar_lea.sflag [#allocation3], %s220
        %s222 = sand.u32 %s31, 1
        %s223 = smul.addr %s222, 16
        %s224 = scalar_lea.vmem [#allocation2], %s223
        %p225 = pneg %p44
        %p226 = pneg %p41
        %s227 = sand.u32 %s23, 1
        %s228 = scalar_lea.sflag [#allocation6], %s227
        %s229 = sand.u32 %s57, 1
        %s230 = smul.addr %s229, 16
        %s231 = scalar_lea.vmem [#allocation5], %s230
        %p232 = pneg %p70
        %p233 = pneg %p67
        %p234 = pneg %p91
        %p235 = pneg %p88
        %p236 = pneg %p117
        %p237 = pneg %p114
        %s238 = sand.u32 %s104, 1
        %s239 = scalar_lea.sflag [#allocation4], %s238
        %s240 = sand.u32 %s104, 1
        %s241 = smul.addr %s240, 16
        %s242 = scalar_lea.vmem [#allocation8], %s241
        %v243 = vld [vmem:[%s202] sm:$0xff]
        %v244 = vld [vmem:[%s202 + $0x8] sm:$0xff]
        %v245 = vld [vmem:[#allocation7] sm:$0xff]
        %v246 = vld [vmem:[#allocation7 + $0x8] sm:$0xff]
        %v247 = vld [vmem:[#allocation7 + $0x10] sm:$0xff]
        %v248 = vld [vmem:[#allocation7 + $0x18] sm:$0xff]
        %v249 = vld [vmem:[#allocation7 + $0x20] sm:$0xff]
        %v250 = vld [vmem:[#allocation7 + $0x28] sm:$0xff]
        %vm251 = vcmask 392192
        %v253 = vsel %vm251, %v243, 0
        %v256 = vsel %vm251, %v244, 0
        %258 = vmatprep.subr.mxu0 0.0
        %259 = vmatpush1.msra.mxu0 %v245
        %260 = vmatprep.subr.mxu0 0.0
        %261 = vmatpush1.msra.mxu0 %v246
        %262 = vmatprep.subr.mxu0 0.0
        %263 = vmatpush1.msra.mxu0 %v247
        %264 = vmatprep.subr.mxu0 0.0
        %265 = vmatpush1.msra.mxu0 %v248
        %266 = vmatprep.subr.mxu0 0.0
        %267 = vmatpush1.msra.mxu0 %v249
        %268 = vmatprep.subr.mxu0 0.0
        %269 = vmatpush1.msra.mxu0 %v250
        %270 = vmatprep.subr.mxu0 0.0
        %271 = vmatpush1.msra.mxu0 0.0
        %272 = vmatprep.subr.mxu0 0.0
        %273 = vmatpush1.msra.mxu0 0.0
        %274 = vmatprep.subr.mxu0 0.0
        %275 = vmatpush1.msra.mxu0 0.0
        %276 = vmatprep.subr.mxu0 0.0
        %277 = vmatpush1.msra.mxu0 0.0
        %278 = vmatprep.subr.mxu0 0.0
        %279 = vmatpush1.msra.mxu0 0.0
        %280 = vmatprep.subr.mxu0 0.0
        %281 = vmatpush1.msra.mxu0 0.0
        %282 = vmatprep.subr.mxu0 0.0
        %283 = vmatpush1.msra.mxu0 0.0
        %284 = vmatprep.subr.mxu0 0.0
        %285 = vmatpush1.msra.mxu0 0.0
        %286 = vmatprep.subr.mxu0 0.0
        %287 = vmatpush1.msra.mxu0 0.0
        %288 = vmatprep.subr.mxu0 0.0
        %289 = vmatpush1.msra.mxu0 0.0
        %290 = vmatprep.subr.mxu0 0.0
        %291 = vmatpush1.msra.mxu0 0.0
        %292 = vmatprep.subr.mxu0 0.0
        %293 = vmatpush1.msra.mxu0 0.0
        %294 = vmatprep.subr.mxu0 0.0
        %295 = vmatpush1.msra.mxu0 0.0
        %296 = vmatprep.subr.mxu0 0.0
        %297 = vmatpush1.msra.mxu0 0.0
        %298 = vmatprep.subr.mxu0 0.0
        %299 = vmatpush1.msra.mxu0 0.0
        %300 = vmatprep.subr.mxu0 0.0
        %301 = vmatpush1.msra.mxu0 0.0
        %302 = vmatprep.subr.mxu0 0.0
        %303 = vmatpush1.msra.mxu0 0.0
        %304 = vmatprep.subr.mxu0 0.0
        %305 = vmatpush1.msra.mxu0 0.0
        %306 = vmatprep.subr.mxu0 0.0
        %307 = vmatpush1.msra.mxu0 0.0
        %308 = vmatprep.subr.mxu0 0.0
        %309 = vmatpush1.msra.mxu0 0.0
        %310 = vmatprep.subr.mxu0 0.0
        %311 = vmatpush1.msra.mxu0 0.0
        %312 = vmatprep.subr.mxu0 0.0
        %313 = vmatpush1.msra.mxu0 0.0
        %314 = vmatprep.subr.mxu0 0.0
        %315 = vmatpush1.msra.mxu0 0.0
        %316 = vmatprep.subr.mxu0 0.0
        %317 = vmatpush1.msra.mxu0 0.0
        %318 = vmatprep.subr.mxu0 0.0
        %319 = vmatpush1.msra.mxu0 0.0
        %320 = vmatprep.subr.mxu0 0.0
        %321 = vmatpush1.msra.mxu0 0.0
        %322 = vmatprep.mubr.f32.mxu0 0.0
        %323 = vmatmul.mubr.f32.gmra.mrb[0].mxu0 %v253
        %v324 = vpop.f32.mrb[0].mxu0
        %v325 = vadd.f32 0.0, %v324
        %v326 = vpop.f32.mrb[0].mxu0
        %327 = vmatprep.mubr.f32.mxu0 0.0
        %328 = vmatmul.mubr.f32.gmra.mrb[0].mxu0 %v256
        %v329 = vpop.f32.mrb[0].mxu0
        %v330 = vadd.f32 0.0, %v329
        %v331 = vpop.f32.mrb[0].mxu0
        %332 = vdwg.mxu0
        %v333 = vld [vmem:[%s211] sm:$0xff]
        %v334 = vld [vmem:[%s211 + $0x8] sm:$0xff]
        %vm335 = vcmask 130048
        %v337 = vsel %vm335, %v333, 0
        %v340 = vsel %vm335, %v334, 0
        %342 = vmatprep.subr.mxu0 0.0
        %343 = vmatpush1.msra.mxu0 %v325
        %344 = vmatprep.subr.mxu0 0.0
        %345 = vmatpush1.msra.mxu0 %v330
        %346 = vmatprep.subr.mxu0 0.0
        %347 = vmatpush1.msra.mxu0 0.0
        %348 = vmatprep.subr.mxu0 0.0
        %349 = vmatpush1.msra.mxu0 0.0
        %350 = vmatprep.subr.mxu0 0.0
        %351 = vmatpush1.msra.mxu0 0.0
        %352 = vmatprep.subr.mxu0 0.0
        %353 = vmatpush1.msra.mxu0 0.0
        %354 = vmatprep.subr.mxu0 0.0
        %355 = vmatpush1.msra.mxu0 0.0
        %356 = vmatprep.subr.mxu0 0.0
        %357 = vmatpush1.msra.mxu0 0.0
        %358 = vmatprep.subr.mxu0 0.0
        %359 = vmatpush1.msra.mxu0 0.0
        %360 = vmatprep.subr.mxu0 0.0
        %361 = vmatpush1.msra.mxu0 0.0
        %362 = vmatprep.subr.mxu0 0.0
        %363 = vmatpush1.msra.mxu0 0.0
        %364 = vmatprep.subr.mxu0 0.0
        %365 = vmatpush1.msra.mxu0 0.0
        %366 = vmatprep.subr.mxu0 0.0
        %367 = vmatpush1.msra.mxu0 0.0
        %368 = vmatprep.subr.mxu0 0.0
        %369 = vmatpush1.msra.mxu0 0.0
        %370 = vmatprep.subr.mxu0 0.0
        %371 = vmatpush1.msra.mxu0 0.0
        %372 = vmatprep.subr.mxu0 0.0
        %373 = vmatpush1.msra.mxu0 0.0
        %374 = vmatprep.subr.mxu0 0.0
        %375 = vmatpush1.msra.mxu0 0.0
        %376 = vmatprep.subr.mxu0 0.0
        %377 = vmatpush1.msra.mxu0 0.0
        %378 = vmatprep.subr.mxu0 0.0
        %379 = vmatpush1.msra.mxu0 0.0
        %380 = vmatprep.subr.mxu0 0.0
        %381 = vmatpush1.msra.mxu0 0.0
        %382 = vmatprep.subr.mxu0 0.0
        %383 = vmatpush1.msra.mxu0 0.0
        %384 = vmatprep.subr.mxu0 0.0
        %385 = vmatpush1.msra.mxu0 0.0
        %386 = vmatprep.subr.mxu0 0.0
        %387 = vmatpush1.msra.mxu0 0.0
        %388 = vmatprep.subr.mxu0 0.0
        %389 = vmatpush1.msra.mxu0 0.0
        %390 = vmatprep.subr.mxu0 0.0
        %391 = vmatpush1.msra.mxu0 0.0
        %392 = vmatprep.subr.mxu0 0.0
        %393 = vmatpush1.msra.mxu0 0.0
        %394 = vmatprep.subr.mxu0 0.0
        %395 = vmatpush1.msra.mxu0 0.0
        %396 = vmatprep.subr.mxu0 0.0
        %397 = vmatpush1.msra.mxu0 0.0
        %398 = vmatprep.subr.mxu0 0.0
        %399 = vmatpush1.msra.mxu0 0.0
        %400 = vmatprep.subr.mxu0 0.0
        %401 = vmatpush1.msra.mxu0 0.0
        %402 = vmatprep.subr.mxu0 0.0
        %403 = vmatpush1.msra.mxu0 0.0
        %404 = vmatprep.subr.mxu0 0.0
        %405 = vmatpush1.msra.mxu0 0.0
        %406 = vmatprep.mubr.f32.mxu0 0.0
        %407 = vmatmul.mubr.f32.gmra.mrb[0].mxu0 %v337
        %v408 = vpop.f32.mrb[0].mxu0
        %v409 = vadd.f32 0.0, %v408
        %v410 = vpop.f32.mrb[0].mxu0
        %411 = vmatprep.mubr.f32.mxu0 0.0
        %412 = vmatmul.mubr.f32.gmra.mrb[0].mxu0 %v340
        %v413 = vpop.f32.mrb[0].mxu0
        %v414 = vadd.f32 0.0, %v413
        %v415 = vpop.f32.mrb[0].mxu0
        %416 = vdwg.mxu0
        %v417 = vmul.f32 %v409, 0.85
        %v418 = vmul.f32 %v414, 0.85
        %419 = vst.msk [vmem:[%s242] sm:$0xff] %vm251, %v417
        %420 = vst.msk [vmem:[%s242 + $0x8] sm:$0xff] %vm251, %v418
        %s421 = sand.u32 %s104, 1
        %s422 = scalar_lea.sflag [#allocation4], %s421
        %s423 = sand.u32 %s104, 1
        %s424 = smul.addr %s423, 16
        %s425 = scalar_lea.vmem [#allocation8], %s424
        // Predicated region
        $region45: #{tpu_custom_call.1} parent=31 // pred_check
          %p426 = pneg %p114
        $region46: #{tpu_custom_call.1} parent=31 // pred_check_branch
          %428 = sbr.rel (%p426) target = $region48
        $region47: #{tpu_custom_call.1} parent=31 // pred_region
          %s430 = ssub.s32 256, 256
          %431 = vsyncadd %s422, %s430
          %s432 = smul.addr %s23, 2
          %s433 = smul.addr %s432, 128
          %s434 = scalar_lea.hbm %s3, %s433
          %s435 = sshll.u32 %s425, 4
          %s436 = int_to_ptr.vmem [resolvable:$true] %s435
          %441 = dma.vmem_to_hbm [thread:$0]  %s436, 256, %s434, %s422, 128, 128, 8
        $region48: #{tpu_custom_call.1} parent=31 // pred_fallthru
          _
      $region32: #{tpu_custom_call.1} parent=5 // pred_fallthru
        _
      %p442 = scmp.le.s32.totalorder 2, %s18
      // Predicated region
      $region49: #{tpu_custom_call.1} parent=5 // pred_check
        %p443 = pneg %p442
      $region50: #{tpu_custom_call.1} parent=5 // pred_check_branch
        %445 = sbr.rel (%p443) target = $region52
      $region51: #{tpu_custom_call.1} parent=5 // pred_region
        %s446 = ssub.s32 %s18, 2
        // Predicated region
        $region53: #{tpu_custom_call.1} parent=51 // pred_check
          %p447 = pneg %p120
        $region54: #{tpu_custom_call.1} parent=51 // pred_check_branch
          %449 = sbr.rel (%p447) target = $region56
        $region55: #{tpu_custom_call.1} parent=51 // pred_region
          %s450 = sand.u32 %s105, 1
          %s451 = scalar_lea.sflag [#allocation4], %s450
          %s452 = sand.u32 %s105, 1
          %s453 = smul.addr %s452, 16
          %s454 = scalar_lea.vmem [#allocation8], %s453
          %455 = dma.done %s451, 256
        $region56: #{tpu_custom_call.1} parent=51 // pred_fallthru
          _
      $region52: #{tpu_custom_call.1} parent=5 // pred_fallthru
        _
    $region6: #{tpu_custom_call.1} parent=1 // loop_footer
      %s22 = sadd.s32 1, %s18
    $region7: #{tpu_custom_call.1} parent=1 // loop_footer_branch
      %17 = sbr.rel target = $region3
    $region8: #{tpu_custom_call.1} parent=1 // loop_exit
      _
    %456 = vsyncpa [#allocation3], 1
    %s457 = scalar_lea.sflag [#allocation3], 1
    %458 = vsyncpa %s457, 1
    %459 = vsyncpa [#allocation6], 1
    %s460 = scalar_lea.sflag [#allocation6], 1
    %461 = vsyncpa %s460, 1
    %462 = vsyncpa [#allocation4], 1
    %s463 = scalar_lea.sflag [#allocation4], 1
    %464 = vsyncpa %s463, 1

</llo_original>
